<compile_context>
chip_gen: v7x
topology: tpu7x:2x2x1
jax: 0.10.0
libtpu: 0.0.40
codegen_flags: <defaults>
</compile_context>

<pallas_src>
import jax
import jax.numpy as jnp
from jax import lax
from jax.experimental import pallas as pl
from jax.experimental.pallas import tpu as pltpu

_EPS = 1e-12
_VMEM_BUDGET_BYTES = 20 * 1024 * 1024  # conservative across v5e / v6e / v7x


def _round_up(x, m):
    return (x + m - 1) // m * m


# ------------------------------------------------------------------------
# One-shot prologue: L2-normalize prototypes (f32 math), emit bf16.
# Runs once per forward call, NOT once per grid step.
# ------------------------------------------------------------------------
def _proto_norm_kernel(p_ref, out_ref):
    p = p_ref[...].astype(jnp.float32)
    inv = lax.rsqrt(jnp.maximum(jnp.sum(p * p, axis=-1, keepdims=True), _EPS))
    out_ref[...] = (p * inv).astype(out_ref.dtype)


def _normalize_prototypes(prototypes, c_pad):
    """Pad C up to a lane-dense multiple of 128 and L2-normalize rows -> bf16."""
    C, D = prototypes.shape
    if c_pad != C:
        prototypes = jnp.pad(prototypes, ((0, c_pad - C), (0, 0)))
    # Whole (c_pad, D) array as a single VMEM block; trivial one-shot kernel.
    # TODO(synk): tile over C if C*D grows beyond a few MiB of VMEM.
    return pl.pallas_call(
        _proto_norm_kernel,
        out_shape=jax.ShapeDtypeStruct((c_pad, D), jnp.bfloat16),
    )(prototypes)


# ------------------------------------------------------------------------
# Main kernel: per-tile feature normalization (+ folded exp(logit_scale)),
# bf16 MXU matmul against the resident, pre-normalized prototypes.
# ------------------------------------------------------------------------
def _probe_matmul_kernel(scale_ref, feat_ref, prot_ref, out_ref):
    # scale_ref : SMEM (1,)            f32  -- exp(logit_scale), precomputed
    # feat_ref  : VMEM (TILE_N, D)     native dtype
    # prot_ref  : VMEM (C_pad, D)      bf16, already L2-normalized
    # out_ref   : VMEM (TILE_N, C_pad) f32
    f = feat_ref[...].astype(jnp.float32)
    # rsqrt -> EUP slot; eps clamp avoids inf/NaN for zero-norm rows.
    inv_f = lax.rsqrt(jnp.maximum(jnp.sum(f * f, axis=-1, keepdims=True), _EPS))
    # Fold exp(logit_scale) into the per-row factor (scaling doesn't change
    # bf16 relative precision), then feed the MXU bf16 operands.
    f_n = (f * (inv_f * scale_ref[0])).astype(jnp.bfloat16)
    # Contract dim 1 of both operands (A @ B.T) -- no materialized transpose.
    out_ref[...] = lax.dot_general(
        f_n, prot_ref[...],
        dimension_numbers=(((1,), (1,)), ((), ())),
        preferred_element_type=jnp.float32,
    ).astype(out_ref.dtype)


def _pick_tile_n(N, D, c_pad, feat_bytes, tile_n_max):
    """Largest N-tile that (a) gives >=2 grid steps for moderate N (v7x megacore)
    and (b) keeps the estimated VMEM footprint under a cross-generation budget."""
    tile = max(8, min(tile_n_max, _round_up(pl.cdiv(N, 2), 8)))

    def est(t):
        feat = 2 * t * D * feat_bytes           # double-buffered feature tiles
        prot = 2 * c_pad * D * 2                # double-buffered bf16 prototypes
        out = 2 * t * c_pad * 4                 # double-buffered f32 output tiles
        tmp = t * D * (4 + 2) + t * c_pad * 4   # f32 upcast + bf16 f_n + f32 logits
        return feat + prot + out + tmp

    while tile > 8 and est(tile) > _VMEM_BUDGET_BYTES:
        tile = max(8, _round_up(tile // 2, 8))
    if tile >= N:  # tiny N degenerates to a single full-extent block
        tile = N
    return tile, est(tile)


def linear_probe_head(features, prototypes, logit_scale, *, tile_n=1024):
    """features [N, D], prototypes [C, D], logit_scale scalar -> logits [N, C] f32."""
    N, D = features.shape
    C, D2 = prototypes.shape
    assert D == D2

    # exp() once on the wrapper side; kernel receives the ready-to-use scale.
    scale = jnp.exp(jnp.asarray(logit_scale, jnp.float32)).reshape((1,))

    # Lane-dense output: pad class dim to a multiple of 128 (unmasked vst),
    # slice the pad off after the call.  Padded prototype rows are zeros and
    # stay zero after normalization (eps clamp), so padded logits are 0.
    c_pad = _round_up(C, 128)
    prototypes_nrm = _normalize_prototypes(prototypes, c_pad)

    feat_bytes = jnp.dtype(features.dtype).itemsize
    tile_n_eff, est_bytes = _pick_tile_n(N, D, c_pad, feat_bytes, tile_n)
    grid = (pl.cdiv(N, tile_n_eff),)
    vmem_limit = int(min(48 * 1024 * 1024, max(32 * 1024 * 1024, 2 * est_bytes)))

    logits_padded = pl.pallas_call(
        _probe_matmul_kernel,
        out_shape=jax.ShapeDtypeStruct((N, c_pad), jnp.float32),
        grid=grid,
        in_specs=[
            pl.BlockSpec(memory_space=pltpu.MemorySpace.SMEM),   # exp(logit_scale)
            pl.BlockSpec((tile_n_eff, D), lambda i: (i, 0)),     # features, native dtype
            # Prototypes: constant index_map -> resident block across the grid.
            # TODO(synk): pipeline_mode=pl.Buffered(1) would drop the redundant
            # second pipeline buffer; kept at the default for lowering safety.
            pl.BlockSpec((c_pad, D), lambda i: (0, 0)),
        ],
        out_specs=pl.BlockSpec((tile_n_eff, c_pad), lambda i: (i, 0)),
        compiler_params=pltpu.CompilerParams(
            dimension_semantics=("parallel",),    # megacore sharding on v7x
            vmem_limit_bytes=vmem_limit,
        ),
    )(scale, features, prototypes_nrm)

    return logits_padded[:, :C] if c_pad != C else logits_padded


class LinearProbeHeadJAX:
    """Deterministic, in-script parameter setup mirroring the torch __init__."""

    def __init__(self, zero_shot_prot, logit_scale, init="zero_shot", key=None):
        self.logit_scale = jnp.asarray(logit_scale, jnp.float32)
        self.zero_shot_prot = jnp.asarray(zero_shot_prot)
        if init == "zero_shot":
            self.prototypes = self.zero_shot_prot
        else:
            # kaiming_normal_ equivalent: std = sqrt(2 / fan_in), fan_in = D
            if key is None:
                key = jax.random.PRNGKey(0)
            C, D = self.zero_shot_prot.shape
            std = jnp.sqrt(2.0 / D)
            self.prototypes = std * jax.random.normal(key, (C, D), jnp.float32)
        # Prototypes are trainable in the torch module, so their normalization
        # runs every forward (one-shot prologue kernel), matching forward().

    def __call__(self, features):
        return linear_probe_head(features, self.prototypes, self.logit_scale)


if __name__ == "__main__":
    key = jax.random.PRNGKey(0)
    k_feat, k_prot = jax.random.split(key)

    N, C, D = 16, 4, 32  # small demo: batch=16, 4 classes, hidden=32 (2 grid steps)
    features = jax.random.normal(k_feat, (N, D), jnp.float32)
    zero_shot_prot = jax.random.normal(k_prot, (C, D), jnp.float32)
    logit_scale = jnp.log(jnp.float32(1.0 / 0.07))  # CLIP-style init

    head = LinearProbeHeadJAX(zero_shot_prot, logit_scale, init="zero_shot")
    logits = head(features)
    jax.block_until_ready(logits)

    # Reference check in plain JAX (f32); kernel uses bf16 MXU operands with f32
    # accumulation, so tolerance is loosened accordingly.
    f_n = features / jnp.linalg.norm(features, axis=-1, keepdims=True)
    p_n = head.prototypes / jnp.linalg.norm(head.prototypes, axis=-1, keepdims=True)
    ref = (f_n @ p_n.T) * jnp.exp(logit_scale)
    assert logits.shape == (N, C)
    assert jnp.allclose(logits, ref, atol=1e-1, rtol=2e-2), float(
        jnp.max(jnp.abs(logits - ref))
    )

    print("KERNEL_OK")
</pallas_src>

<mosaic_0001>
module attributes {stable_mosaic.version = 11 : i64} {
  func.func @_proto_norm_kernel(%arg0: memref<128x32xf32, #tpu.memory_space<vmem>>, %arg1: memref<128x32xbf16, #tpu.memory_space<vmem>>) attributes {dimension_semantics = [], scalar_prefetch = 0 : i64, scratch_operands = 0 : i64, tpu.core_type = #tpu.core_type<tc>} {
    %c0 = arith.constant 0 : index
    %c0_0 = arith.constant 0 : index
    %0 = vector.load %arg0[%c0, %c0_0] : memref<128x32xf32, #tpu.memory_space<vmem>>, vector<128x32xf32>
    %1 = arith.mulf %0, %0 : vector<128x32xf32>
    %cst = arith.constant dense<0.000000e+00> : vector<128xf32>
    %2 = vector.multi_reduction <add>, %1, %cst [1] : vector<128x32xf32> to vector<128xf32>
    %3 = vector.shape_cast %2 : vector<128xf32> to vector<128x1xf32>
    %cst_1 = arith.constant 9.99999996E-13 : f32
    %4 = vector.broadcast %cst_1 : f32 to vector<128x1xf32>
    %5 = arith.maximumf %3, %4 : vector<128x1xf32>
    %6 = math.rsqrt %5 : vector<128x1xf32>
    %7 = vector.broadcast %6 : vector<128x1xf32> to vector<128x32xf32>
    %8 = arith.mulf %0, %7 : vector<128x32xf32>
    %9 = arith.truncf %8 : vector<128x32xf32> to vector<128x32xbf16>
    %c0_2 = arith.constant 0 : index
    %c0_3 = arith.constant 0 : index
    %10 = vector.load %arg1[%c0_2, %c0_3] : memref<128x32xbf16, #tpu.memory_space<vmem>>, vector<128x32xbf16>
    tpu.vector_store %arg1[%c0_2, %c0_3], %9 {strides = array<i32>} : memref<128x32xbf16, #tpu.memory_space<vmem>>, vector<128x32xbf16>,
    return
  }
}

</mosaic_0001>

<llo_original>
// kernel: tpu_custom_call.1
$region0: #{tpu_custom_call.1}
  #allocation0 [shape = 'u32[]', space=smem, size = 0x4, offset = 0x4, fixed_abs, tag = 'smem constant byte address 0x4 - core index']
  #allocation1 [shape = 'u32[144,128]{1,0:T(1,128)}', space=vmem, size = 0x12000, scoped, tag = 'internal scratch']
  %s0 = inlined_call_operand.vmem [shape: f32[128,32], index: 0, kind: input, shape index: {}]
  %s1 = inlined_call_operand.vmem [shape: bf16[128,32], index: 1, kind: output, shape index: {}]
  %s2 = sld [smem:[#allocation0]]
  $region14: #{tpu_custom_call.1} parent=0
    _
  %s4 = ssub.s32 1, %s2
  %s5 = scalar_select 0, %s4, %s2
  // Predicated region
  $region2: #{tpu_custom_call.1} parent=0 // pred_check
    _
  $region3: #{tpu_custom_call.1} parent=0 // pred_check_branch
    %7 = sbr.rel (0) target = $region5
  $region4: #{tpu_custom_call.1} parent=0 // pred_region
    _
  $region5: #{tpu_custom_call.1} parent=0 // pred_fallthru
    _
  %v8 = vld [vmem:[%s0] sm:$0xff]
  %v9 = vld [vmem:[%s0 + $0x8] sm:$0xff]
  %v10 = vld [vmem:[%s0 + $0x10] sm:$0xff]
  %v11 = vld [vmem:[%s0 + $0x18] sm:$0xff]
  %v12 = vld [vmem:[%s0 + $0x20] sm:$0xff]
  %v13 = vld [vmem:[%s0 + $0x28] sm:$0xff]
  %v14 = vld [vmem:[%s0 + $0x30] sm:$0xff]
  %v15 = vld [vmem:[%s0 + $0x38] sm:$0xff]
  %v16 = vld [vmem:[%s0 + $0x40] sm:$0xff]
  %v17 = vld [vmem:[%s0 + $0x48] sm:$0xff]
  %v18 = vld [vmem:[%s0 + $0x50] sm:$0xff]
  %v19 = vld [vmem:[%s0 + $0x58] sm:$0xff]
  %v20 = vld [vmem:[%s0 + $0x60] sm:$0xff]
  %v21 = vld [vmem:[%s0 + $0x68] sm:$0xff]
  %v22 = vld [vmem:[%s0 + $0x70] sm:$0xff]
  %v23 = vld [vmem:[%s0 + $0x78] sm:$0xff]
  %v24 = vmul.f32 %v8, %v8
  %v25 = vmul.f32 %v9, %v9
  %v26 = vmul.f32 %v10, %v10
  %v27 = vmul.f32 %v11, %v11
  %v28 = vmul.f32 %v12, %v12
  %v29 = vmul.f32 %v13, %v13
  %v30 = vmul.f32 %v14, %v14
  %v31 = vmul.f32 %v15, %v15
  %v32 = vmul.f32 %v16, %v16
  %v33 = vmul.f32 %v17, %v17
  %v34 = vmul.f32 %v18, %v18
  %v35 = vmul.f32 %v19, %v19
  %v36 = vmul.f32 %v20, %v20
  %v37 = vmul.f32 %v21, %v21
  %v38 = vmul.f32 %v22, %v22
  %v39 = vmul.f32 %v23, %v23
  %vm40 = vcmask 261120
  %v41 = vsel %vm40, %v24, 0.0
  %42 = vadd.xlane.f32.xlu0 %v41
  %v43 = vpop.xlane.xlu0 %42
  %v44 = vsel %vm40, %v25, 0.0
  %45 = vadd.xlane.f32.xlu0 %v44
  %v46 = vpop.xlane.xlu0 %45
  %v47 = vsel %vm40, %v26, 0.0
  %48 = vadd.xlane.f32.xlu0 %v47
  %v49 = vpop.xlane.xlu0 %48
  %v50 = vsel %vm40, %v27, 0.0
  %51 = vadd.xlane.f32.xlu0 %v50
  %v52 = vpop.xlane.xlu0 %51
  %v53 = vsel %vm40, %v28, 0.0
  %54 = vadd.xlane.f32.xlu0 %v53
  %v55 = vpop.xlane.xlu0 %54
  %v56 = vsel %vm40, %v29, 0.0
  %57 = vadd.xlane.f32.xlu0 %v56
  %v58 = vpop.xlane.xlu0 %57
  %v59 = vsel %vm40, %v30, 0.0
  %60 = vadd.xlane.f32.xlu0 %v59
  %v61 = vpop.xlane.xlu0 %60
  %v62 = vsel %vm40, %v31, 0.0
  %63 = vadd.xlane.f32.xlu0 %v62
  %v64 = vpop.xlane.xlu0 %63
  %v65 = vsel %vm40, %v32, 0.0
  %66 = vadd.xlane.f32.xlu0 %v65
  %v67 = vpop.xlane.xlu0 %66
  %v68 = vsel %vm40, %v33, 0.0
  %69 = vadd.xlane.f32.xlu0 %v68
  %v70 = vpop.xlane.xlu0 %69
  %v71 = vsel %vm40, %v34, 0.0
  %72 = vadd.xlane.f32.xlu0 %v71
  %v73 = vpop.xlane.xlu0 %72
  %v74 = vsel %vm40, %v35, 0.0
  %75 = vadd.xlane.f32.xlu0 %v74
  %v76 = vpop.xlane.xlu0 %75
  %v77 = vsel %vm40, %v36, 0.0
  %78 = vadd.xlane.f32.xlu0 %v77
  %v79 = vpop.xlane.xlu0 %78
  %v80 = vsel %vm40, %v37, 0.0
  %81 = vadd.xlane.f32.xlu0 %v80
  %v82 = vpop.xlane.xlu0 %81
  %v83 = vsel %vm40, %v38, 0.0
  %84 = vadd.xlane.f32.xlu0 %v83
  %v85 = vpop.xlane.xlu0 %84
  %v86 = vsel %vm40, %v39, 0.0
  %87 = vadd.xlane.f32.xlu0 %v86
  %v88 = vpop.xlane.xlu0 %87
  %v89 = vmax.f32 %v43, 1e-12
  %v90 = vmax.f32 %v46, 1e-12
  %v91 = vmax.f32 %v49, 1e-12
  %v92 = vmax.f32 %v52, 1e-12
  %v93 = vmax.f32 %v55, 1e-12
  %v94 = vmax.f32 %v58, 1e-12
  %v95 = vmax.f32 %v61, 1e-12
  %v96 = vmax.f32 %v64, 1e-12
  %v97 = vmax.f32 %v67, 1e-12
  %v98 = vmax.f32 %v70, 1e-12
  %v99 = vmax.f32 %v73, 1e-12
  %v100 = vmax.f32 %v76, 1e-12
  %v101 = vmax.f32 %v79, 1e-12
  %v102 = vmax.f32 %v82, 1e-12
  %v103 = vmax.f32 %v85, 1e-12
  %v104 = vmax.f32 %v88, 1e-12
  %v105 = vrsqrt.pop %v89
  %v106 = vrsqrt.pop %v90
  %v107 = vrsqrt.pop %v91
  %v108 = vrsqrt.pop %v92
  %v109 = vrsqrt.pop %v93
  %v110 = vrsqrt.pop %v94
  %v111 = vrsqrt.pop %v95
  %v112 = vrsqrt.pop %v96
  %v113 = vrsqrt.pop %v97
  %v114 = vrsqrt.pop %v98
  %v115 = vrsqrt.pop %v99
  %v116 = vrsqrt.pop %v100
  %v117 = vrsqrt.pop %v101
  %v118 = vrsqrt.pop %v102
  %v119 = vrsqrt.pop %v103
  %v120 = vrsqrt.pop %v104
  %v121 = vmul.f32 %v8, %v105
  %v122 = vmul.f32 %v9, %v106
  %v123 = vmul.f32 %v10, %v107
  %v124 = vmul.f32 %v11, %v108
  %v125 = vmul.f32 %v12, %v109
  %v126 = vmul.f32 %v13, %v110
  %v127 = vmul.f32 %v14, %v111
  %v128 = vmul.f32 %v15, %v112
  %v129 = vmul.f32 %v16, %v113
  %v130 = vmul.f32 %v17, %v114
  %v131 = vmul.f32 %v18, %v115
  %v132 = vmul.f32 %v19, %v116
  %v133 = vmul.f32 %v20, %v117
  %v134 = vmul.f32 %v21, %v118
  %v135 = vmul.f32 %v22, %v119
  %v136 = vmul.f32 %v23, %v120
  %v137 = vpack.c.bf16 %v122, %v121
  %v138 = vpack.c.bf16 %v124, %v123
  %v139 = vpack.c.bf16 %v126, %v125
  %v140 = vpack.c.bf16 %v128, %v127
  %v141 = vpack.c.bf16 %v130, %v129
  %v142 = vpack.c.bf16 %v132, %v131
  %v143 = vpack.c.bf16 %v134, %v133
  %v144 = vpack.c.bf16 %v136, %v135
  %v153 = vunpack.c.l.b16 %v137
  %v154 = vunpack.c.h.b16 %v137
  %v155 = vunpack.c.l.b16 %v138
  %v156 = vunpack.c.h.b16 %v138
  %v157 = vunpack.c.l.b16 %v139
  %v158 = vunpack.c.h.b16 %v139
  %v159 = vunpack.c.l.b16 %v140
  %v160 = vunpack.c.h.b16 %v140
  %v161 = vunpack.c.l.b16 %v141
  %v162 = vunpack.c.h.b16 %v141
  %v163 = vunpack.c.l.b16 %v142
  %v164 = vunpack.c.h.b16 %v142
  %v165 = vunpack.c.l.b16 %v143
  %v166 = vunpack.c.h.b16 %v143
  %v167 = vunpack.c.l.b16 %v144
  %v168 = vunpack.c.h.b16 %v144
  %v169 = vpack.c.b16 %v153, %v153
  %v170 = vpack.c.b16 %v154, %v154
  %v171 = vpack.c.b16 %v155, %v155
  %v172 = vpack.c.b16 %v156, %v156
  %v173 = vpack.c.b16 %v157, %v157
  %v174 = vpack.c.b16 %v158, %v158
  %v175 = vpack.c.b16 %v159, %v159
  %v176 = vpack.c.b16 %v160, %v160
  %v177 = vpack.c.b16 %v161, %v161
  %v178 = vpack.c.b16 %v162, %v162
  %v179 = vpack.c.b16 %v163, %v163
  %v180 = vpack.c.b16 %v164, %v164
  %v181 = vpack.c.b16 %v165, %v165
  %v182 = vpack.c.b16 %v166, %v166
  %v183 = vpack.c.b16 %v167, %v167
  %v184 = vpack.c.b16 %v168, %v168
  %vm201 = vcmask 257024
  %202 = vst.msk [vmem:[%s1] sm:$0xf] %vm201, %v169
  %203 = vst.msk [vmem:[%s1 + $0x4] sm:$0xf] %vm201, %v170
  %204 = vst.msk [vmem:[%s1 + $0x8] sm:$0xf] %vm201, %v171
  %205 = vst.msk [vmem:[%s1 + $0xc] sm:$0xf] %vm201, %v172
  %206 = vst.msk [vmem:[%s1 + $0x10] sm:$0xf] %vm201, %v173
  %207 = vst.msk [vmem:[%s1 + $0x14] sm:$0xf] %vm201, %v174
  %208 = vst.msk [vmem:[%s1 + $0x18] sm:$0xf] %vm201, %v175
  %209 = vst.msk [vmem:[%s1 + $0x1c] sm:$0xf] %vm201, %v176
  %210 = vst.msk [vmem:[%s1 + $0x20] sm:$0xf] %vm201, %v177
  %211 = vst.msk [vmem:[%s1 + $0x24] sm:$0xf] %vm201, %v178
  %212 = vst.msk [vmem:[%s1 + $0x28] sm:$0xf] %vm201, %v179
  %213 = vst.msk [vmem:[%s1 + $0x2c] sm:$0xf] %vm201, %v180
  %214 = vst.msk [vmem:[%s1 + $0x30] sm:$0xf] %vm201, %v181
  %215 = vst.msk [vmem:[%s1 + $0x34] sm:$0xf] %vm201, %v182
  %216 = vst.msk [vmem:[%s1 + $0x38] sm:$0xf] %vm201, %v183
  %217 = vst.msk [vmem:[%s1 + $0x3c] sm:$0xf] %vm201, %v184
  // Predicated region
  $region6: #{tpu_custom_call.1} parent=0 // pred_check
    _
  $region7: #{tpu_custom_call.1} parent=0 // pred_check_branch
    %219 = sbr.rel (0) target = $region9
  $region8: #{tpu_custom_call.1} parent=0 // pred_region
    _
  $region9: #{tpu_custom_call.1} parent=0 // pred_fallthru
    _
  // Predicated region
  $region10: #{tpu_custom_call.1} parent=0 // pred_check
    _
  $region11: #{tpu_custom_call.1} parent=0 // pred_check_branch
    %221 = sbr.rel (0) target = $region13
  $region12: #{tpu_custom_call.1} parent=0 // pred_region
    _
  $region13: #{tpu_custom_call.1} parent=0 // pred_fallthru
    _

</llo_original>
